<compile_context>
chip_gen: v7x
topology: tpu7x:2x2x1
jax: 0.10.0
libtpu: 0.0.40
codegen_flags: <defaults>
</compile_context>

<pallas_src>
import math

import jax
import jax.numpy as jnp
from jax import lax
from jax.experimental import pallas as pl
from jax.experimental.pallas import tpu as pltpu

d_k = 64
d_v = 64
NEG_INF = -1000000000.0      # matches scores.masked_fill_(attn_mask, -1e9)
NEG_PAD = -2.0e9             # strictly below NEG_INF: padded key columns stay excluded
                             # even for fully-masked rows (keeps torch semantics).
INV_SQRT_DK = 1.0 / math.sqrt(d_k)


def _attention_kernel(q_ref, k_ref, v_ref, mask_ref, bias_ref, ctx_ref, attn_ref):
    # Blocks: q (G,TQ,D), k/v (G,S,D), mask/bias/attn (G,TQ,S), ctx (G,TQ,D)
    q = q_ref[...] * INV_SQRT_DK                       # scale the small (TQ,D) side

    scores = lax.dot_general(                          # (G,TQ,S), no explicit K transpose
        q, k_ref[...],
        dimension_numbers=(((2,), (2,)), ((0,), (0,))),
        preferred_element_type=jnp.float32)
    scores = scores + bias_ref[...]
    # In-kernel masked_fill (exact replace semantics, incl. fully-masked rows);
    # mask streamed as int8 instead of a pre-folded f32 bias pass on the host.
    scores = jnp.where(mask_ref[...] != 0, NEG_INF, scores)

    # softmax(dim=-1)
    m = jnp.max(scores, axis=-1, keepdims=True)
    e = jnp.exp(scores - m)
    denom = jnp.sum(e, axis=-1, keepdims=True)
    # Exact reciprocal: it is only (G,TQ,1)-sized, approx=True saved nothing and
    # introduced ~2^-12 error into every output element.
    attn = e * pl.reciprocal(denom, approx=False)

    ctx = lax.dot_general(                             # (G,TQ,D)
        attn, v_ref[...],
        dimension_numbers=(((2,), (1,)), ((0,), (0,))),
        preferred_element_type=jnp.float32)

    ctx_ref[...] = ctx.astype(ctx_ref.dtype)
    attn_ref[...] = attn.astype(attn_ref.dtype)


def _round_up(x, m):
    return ((x + m - 1) // m) * m


def _vmem_limit_bytes():
    cap = 128 * 1024 * 1024
    try:
        cap = int(pltpu.get_tpu_info().vmem_capacity_bytes)
    except Exception:
        pass
    # ~48 MiB on v7x (64 MiB physical per TC), ~96 MiB on v5e/v6e (128 MiB physical).
    return min((cap * 3) // 4, 96 * 1024 * 1024)


def _block_bytes(g, tq, s, d):
    """VMEM bytes for one grid step with head-batch g."""
    # Double-buffered pipelined I/O: f32 q/ctx/k/v/bias/attn + int8 mask ...
    io = 2 * (4 * (2 * tq * d + 2 * s * d + 2 * tq * s) + 1 * tq * s)
    # ... plus live in-body f32 temporaries (scores, e, attn).
    tmp = 3 * 4 * tq * s
    return g * (io + tmp)


def _pick_heads_per_block(BH, s, tq, d, budget):
    """Largest G dividing BH that fits the VMEM budget and keeps >= 2 head-blocks
    so the megacore split lands on the head axis (K/V reuse stays within a core)."""
    best = None
    for g in range(1, BH + 1):
        if BH % g:
            continue
        if _block_bytes(g, tq, s, d) > budget:
            break
        if g > 1 and BH >= 2 and BH // g < 2:
            continue
        best = g
    return best


def _choose_tiling(BH, S, D, budget):
    if S <= 512:
        candidates = [(S, S)]                       # single query tile, no padding
    else:
        s_pad = _round_up(S, 128)
        candidates = [(s_pad, tq) for tq in (512, 256, 128) if s_pad % tq == 0]
    for s_pad, tq in candidates:
        g = _pick_heads_per_block(BH, s_pad, tq, D, budget)
        if g is not None:
            return s_pad, tq, g
    # TODO(synk): tile the key/value axis (flash-style online softmax) for S too
    # large to hold a full (TQ, S) score row block in VMEM.
    raise ValueError(
        f"sequence length {S} too large for single-pass softmax within the "
        f"VMEM budget ({budget} bytes)")


def scaled_dot_product_attention_encoder(Q, K, V, attn_mask, MD_bias):
    """Pallas equivalent of ScaledDotProductAttention_encoder.forward.

    Q, K, V:    float32 [B, H, S, d_k]
    attn_mask:  bool    [B, H, S, S]   (True => masked)
    MD_bias:    float32 [B, H, S, S]
    Returns (context [B,H,S,d_k], attn [B,H,S,S]).
    """
    B, H, S, D = Q.shape
    BH = B * H

    q = Q.reshape(BH, S, D).astype(jnp.float32)
    k = K.reshape(BH, S, D).astype(jnp.float32)
    v = V.reshape(BH, S, D).astype(jnp.float32)
    bias = MD_bias.reshape(BH, S, S).astype(jnp.float32)
    mask = attn_mask.reshape(BH, S, S).astype(jnp.int8)   # 1 B/elem mask stream

    vmem_limit = _vmem_limit_bytes()
    budget = int(vmem_limit * 0.8)                        # headroom for compiler scratch
    S_pad, TQ, G = _choose_tiling(BH, S, D, budget)

    if S_pad != S:
        p = S_pad - S
        q = jnp.pad(q, ((0, 0), (0, p), (0, 0)))
        k = jnp.pad(k, ((0, 0), (0, p), (0, 0)))
        v = jnp.pad(v, ((0, 0), (0, p), (0, 0)))
        # Padded query rows: zeros (their outputs are sliced off). Padded key
        # columns: bias strictly below NEG_INF so they drop out of the softmax
        # even for fully-masked rows (mask stays 0 there).
        bias = jnp.pad(bias, ((0, 0), (0, p), (0, 0)))
        bias = jnp.pad(bias, ((0, 0), (0, 0), (0, p)), constant_values=NEG_PAD)
        mask = jnp.pad(mask, ((0, 0), (0, p), (0, p)))

    grid = (BH // G, S_pad // TQ)

    q_spec = pl.BlockSpec((G, TQ, D), lambda i, j: (i, j, 0))
    kv_spec = pl.BlockSpec((G, S_pad, D), lambda i, j: (i, 0, 0))
    sxs_spec = pl.BlockSpec((G, TQ, S_pad), lambda i, j: (i, j, 0))
    ctx_spec = pl.BlockSpec((G, TQ, D), lambda i, j: (i, j, 0))

    ctx, attn = pl.pallas_call(
        _attention_kernel,
        grid=grid,
        in_specs=[q_spec, kv_spec, kv_spec, sxs_spec, sxs_spec],
        out_specs=[ctx_spec, sxs_spec],
        out_shape=(
            jax.ShapeDtypeStruct((BH, S_pad, D), jnp.float32),
            jax.ShapeDtypeStruct((BH, S_pad, S_pad), jnp.float32),
        ),
        compiler_params=pltpu.CompilerParams(
            # Head axis parallel (megacore); q-tile axis sequential so the (G,S,D)
            # K/V blocks are reused across q-tiles instead of re-DMAed per core.
            dimension_semantics=("parallel", "arbitrary"),
            vmem_limit_bytes=vmem_limit,
        ),
    )(q, k, v, mask, bias)

    if S_pad != S:
        ctx = ctx[:, :S, :]
        attn = attn[:, :S, :S]
    # TODO(synk): emit ctx as a lane-dense [B, S, H*D] block if the consumer accepts
    # merged-head layout (D=64 < 128 makes ctx stores half-masked vst.msk).
    return ctx.reshape(B, H, S, D), attn.reshape(B, H, S, S)


def _reference(Q, K, V, attn_mask, MD_bias):
    scores = jnp.einsum("bhqd,bhkd->bhqk", Q, K) / math.sqrt(d_k)
    scores = scores + MD_bias
    scores = jnp.where(attn_mask, NEG_INF, scores)
    attn = jax.nn.softmax(scores, axis=-1)
    context = jnp.einsum("bhqk,bhkd->bhqd", attn, V)
    return context, attn


if __name__ == "__main__":
    B, H, S = 2, 2, 8  # small batch / heads / seq; d_k = d_v = 64 fixed by module

    key = jax.random.PRNGKey(0)
    kq, kk, kv, kb, km = jax.random.split(key, 5)

    Q = jax.random.normal(kq, (B, H, S, d_k), dtype=jnp.float32)
    K = jax.random.normal(kk, (B, H, S, d_k), dtype=jnp.float32)
    V = jax.random.normal(kv, (B, H, S, d_v), dtype=jnp.float32)
    MD_bias = jax.random.normal(kb, (B, H, S, S), dtype=jnp.float32)
    # Deterministic mask: mask ~20% of positions, but never an entire row.
    attn_mask = jax.random.uniform(km, (B, H, S, S)) < 0.2
    attn_mask = attn_mask.at[..., 0].set(False)

    ctx, attn = scaled_dot_product_attention_encoder(Q, K, V, attn_mask, MD_bias)
    jax.block_until_ready((ctx, attn))

    ctx_ref, attn_ref = _reference(Q, K, V, attn_mask, MD_bias)
    # All-f32 path with exact reciprocal -> tight tolerances.
    assert jnp.allclose(ctx, ctx_ref, atol=1e-5, rtol=1e-5), "context mismatch"
    assert jnp.allclose(attn, attn_ref, atol=1e-5, rtol=1e-5), "attn mismatch"

    print("KERNEL_OK")
</pallas_src>

<mosaic_0001>
module attributes {stable_mosaic.version = 11 : i64} {
  func.func @_attention_kernel(%arg0: i32, %arg1: i32, %arg2: memref<2x8x64xf32, #tpu.memory_space<vmem>>, %arg3: memref<2x8x64xf32, #tpu.memory_space<vmem>>, %arg4: memref<2x8x64xf32, #tpu.memory_space<vmem>>, %arg5: memref<2x8x8xi8, #tpu.memory_space<vmem>>, %arg6: memref<2x8x8xf32, #tpu.memory_space<vmem>>, %arg7: memref<2x8x64xf32, #tpu.memory_space<vmem>>, %arg8: memref<2x8x8xf32, #tpu.memory_space<vmem>>) attributes {dimension_semantics = [#tpu.dimension_semantics<parallel>, #tpu.dimension_semantics<arbitrary>], iteration_bounds = array<i64: 2, 1>, scalar_prefetch = 0 : i64, scratch_operands = 0 : i64, tpu.core_type = #tpu.core_type<tc>, window_params = [{transform_indices = @transform_0, window_bounds = array<i64: 2, 8, 64>}, {transform_indices = @transform_1, window_bounds = array<i64: 2, 8, 64>}, {transform_indices = @transform_2, window_bounds = array<i64: 2, 8, 64>}, {transform_indices = @transform_3, window_bounds = array<i64: 2, 8, 8>}, {transform_indices = @transform_4, window_bounds = array<i64: 2, 8, 8>}, {transform_indices = @transform_5, window_bounds = array<i64: 2, 8, 64>}, {transform_indices = @transform_6, window_bounds = array<i64: 2, 8, 8>}]} {
    %c0 = arith.constant 0 : index
    %c0_0 = arith.constant 0 : index
    %c0_1 = arith.constant 0 : index
    %0 = vector.load %arg2[%c0, %c0_0, %c0_1] : memref<2x8x64xf32, #tpu.memory_space<vmem>>, vector<2x8x64xf32>
    %cst = arith.constant 1.250000e-01 : f32
    %1 = vector.broadcast %cst : f32 to vector<2x8x64xf32>
    %2 = arith.mulf %0, %1 : vector<2x8x64xf32>
    %c0_2 = arith.constant 0 : index
    %c0_3 = arith.constant 0 : index
    %c0_4 = arith.constant 0 : index
    %3 = vector.load %arg3[%c0_2, %c0_3, %c0_4] : memref<2x8x64xf32, #tpu.memory_space<vmem>>, vector<2x8x64xf32>
    %cst_5 = arith.constant dense<0.000000e+00> : vector<2x8x8xf32>
    %4 = tpu.matmul %2, %3, %cst_5 {dimension_numbers = #tpu.dot_dimension_numbers<[2], [2], [1], [1], [0, 0, 0, 1, 1, 1], [0], [0]>} : vector<2x8x64xf32>, vector<2x8x64xf32>, vector<2x8x8xf32> -> vector<2x8x8xf32>
    %c0_6 = arith.constant 0 : index
    %c0_7 = arith.constant 0 : index
    %c0_8 = arith.constant 0 : index
    %5 = vector.load %arg6[%c0_6, %c0_7, %c0_8] : memref<2x8x8xf32, #tpu.memory_space<vmem>>, vector<2x8x8xf32>
    %6 = arith.addf %4, %5 : vector<2x8x8xf32>
    %c0_9 = arith.constant 0 : index
    %c0_10 = arith.constant 0 : index
    %c0_11 = arith.constant 0 : index
    %7 = vector.load %arg5[%c0_9, %c0_10, %c0_11] : memref<2x8x8xi8, #tpu.memory_space<vmem>>, vector<2x8x8xi8>
    %c0_i8 = arith.constant 0 : i8
    %8 = vector.broadcast %c0_i8 : i8 to vector<2x8x8xi8>
    %9 = arith.cmpi ne, %7, %8 : vector<2x8x8xi8>
    %cst_12 = arith.constant -1.000000e+09 : f32
    %10 = vector.broadcast %cst_12 : f32 to vector<2x8x8xf32>
    %11 = arith.select %9, %10, %6 : vector<2x8x8xi1>, vector<2x8x8xf32>
    %cst_13 = arith.constant dense<0xFF800000> : vector<2x8xf32>
    %12 = vector.multi_reduction <maximumf>, %11, %cst_13 [2] : vector<2x8x8xf32> to vector<2x8xf32>
    %13 = vector.shape_cast %12 : vector<2x8xf32> to vector<2x8x1xf32>
    %14 = vector.broadcast %13 : vector<2x8x1xf32> to vector<2x8x8xf32>
    %15 = arith.subf %11, %14 : vector<2x8x8xf32>
    %16 = math.exp %15 : vector<2x8x8xf32>
    %cst_14 = arith.constant dense<0.000000e+00> : vector<2x8xf32>
    %17 = vector.multi_reduction <add>, %16, %cst_14 [2] : vector<2x8x8xf32> to vector<2x8xf32>
    %18 = vector.shape_cast %17 : vector<2x8xf32> to vector<2x8x1xf32>
    %19 = tpu.reciprocal %18 : vector<2x8x1xf32> -> vector<2x8x1xf32>
    %20 = vector.broadcast %19 : vector<2x8x1xf32> to vector<2x8x8xf32>
    %21 = arith.mulf %16, %20 : vector<2x8x8xf32>
    %c0_15 = arith.constant 0 : index
    %c0_16 = arith.constant 0 : index
    %c0_17 = arith.constant 0 : index
    %22 = vector.load %arg4[%c0_15, %c0_16, %c0_17] : memref<2x8x64xf32, #tpu.memory_space<vmem>>, vector<2x8x64xf32>
    %cst_18 = arith.constant dense<0.000000e+00> : vector<2x8x64xf32>
    %23 = tpu.matmul %21, %22, %cst_18 {dimension_numbers = #tpu.dot_dimension_numbers<[2], [1], [1], [2], [0, 0, 0, 1, 1, 2], [0], [0]>} : vector<2x8x8xf32>, vector<2x8x64xf32>, vector<2x8x64xf32> -> vector<2x8x64xf32>
    %c0_19 = arith.constant 0 : index
    %c0_20 = arith.constant 0 : index
    %c0_21 = arith.constant 0 : index
    %24 = vector.load %arg7[%c0_19, %c0_20, %c0_21] : memref<2x8x64xf32, #tpu.memory_space<vmem>>, vector<2x8x64xf32>
    tpu.vector_store %arg7[%c0_19, %c0_20, %c0_21], %23 {strides = array<i32>} : memref<2x8x64xf32, #tpu.memory_space<vmem>>, vector<2x8x64xf32>,
    %c0_22 = arith.constant 0 : index
    %c0_23 = arith.constant 0 : index
    %c0_24 = arith.constant 0 : index
    %25 = vector.load %arg8[%c0_22, %c0_23, %c0_24] : memref<2x8x8xf32, #tpu.memory_space<vmem>>, vector<2x8x8xf32>
    tpu.vector_store %arg8[%c0_22, %c0_23, %c0_24], %21 {strides = array<i32>} : memref<2x8x8xf32, #tpu.memory_space<vmem>>, vector<2x8x8xf32>,
    return
  }
  func.func @transform_0(%arg0: i32, %arg1: i32) -> (i32, i32, i32) {
    %c0_i32 = arith.constant 0 : i32
    %c0_i32_0 = arith.constant 0 : i32
    return %arg0, %arg1, %c0_i32 : i32, i32, i32
  }
  func.func @transform_1(%arg0: i32, %arg1: i32) -> (i32, i32, i32) {
    %c0_i32 = arith.constant 0 : i32
    %c0_i32_0 = arith.constant 0 : i32
    %c0_i32_1 = arith.constant 0 : i32
    return %arg0, %c0_i32, %c0_i32_0 : i32, i32, i32
  }
  func.func @transform_2(%arg0: i32, %arg1: i32) -> (i32, i32, i32) {
    %c0_i32 = arith.constant 0 : i32
    %c0_i32_0 = arith.constant 0 : i32
    %c0_i32_1 = arith.constant 0 : i32
    return %arg0, %c0_i32, %c0_i32_0 : i32, i32, i32
  }
  func.func @transform_3(%arg0: i32, %arg1: i32) -> (i32, i32, i32) {
    %c0_i32 = arith.constant 0 : i32
    %c0_i32_0 = arith.constant 0 : i32
    return %arg0, %arg1, %c0_i32 : i32, i32, i32
  }
  func.func @transform_4(%arg0: i32, %arg1: i32) -> (i32, i32, i32) {
    %c0_i32 = arith.constant 0 : i32
    %c0_i32_0 = arith.constant 0 : i32
    return %arg0, %arg1, %c0_i32 : i32, i32, i32
  }
  func.func @transform_5(%arg0: i32, %arg1: i32) -> (i32, i32, i32) {
    %c0_i32 = arith.constant 0 : i32
    %c0_i32_0 = arith.constant 0 : i32
    return %arg0, %arg1, %c0_i32 : i32, i32, i32
  }
  func.func @transform_6(%arg0: i32, %arg1: i32) -> (i32, i32, i32) {
    %c0_i32 = arith.constant 0 : i32
    %c0_i32_0 = arith.constant 0 : i32
    return %arg0, %arg1, %c0_i32 : i32, i32, i32
  }
}

</mosaic_0001>

<llo_original>
// kernel: tpu_custom_call.1
$region0: #{tpu_custom_call.1}
  #allocation0 [shape = 'u32[]', space=smem, size = 0x4, offset = 0x4, fixed_abs, tag = 'smem constant byte address 0x4 - core index']
  #allocation1 [shape = 'u32[144,128]{1,0:T(1,128)}', space=vmem, size = 0x12000, scoped, tag = 'internal scratch']
  %s0 = inlined_call_operand.hbm [shape: f32[4,8,64], index: 0, kind: input, shape index: {}]
  %s1 = inlined_call_operand.hbm [shape: f32[4,8,64], index: 1, kind: input, shape index: {}]
  %s2 = inlined_call_operand.hbm [shape: f32[4,8,64], index: 2, kind: input, shape index: {}]
  %s3 = inlined_call_operand.hbm [shape: s8[4,8,8], index: 3, kind: input, shape index: {}]
  %s4 = inlined_call_operand.hbm [shape: f32[4,8,8], index: 4, kind: input, shape index: {}]
  %s5 = inlined_call_operand.hbm [shape: f32[4,8,64], index: 5, kind: output, shape index: {0}]
  %s6 = inlined_call_operand.hbm [shape: f32[4,8,8], index: 6, kind: output, shape index: {1}]
  %7 = xla_tuple %s5, %s6
  %s8 = sld [smem:[#allocation0]]
  $region81: #{tpu_custom_call.1} parent=0
    _
  %s10 = ssub.s32 1, %s8
  %s11 = scalar_select 0, %s10, %s8
  $region1: #{tpu_custom_call.1} parent=0
    #allocation2 [shape = 'u8[16384]{0}', space=vmem, size = 0x4000, scoped, tag = 'input window, operand 0']
    #allocation3 [shape = 's32[2]{0}', space=sflag, size = 0x8, scoped, tag = 'scoped memory for tpu_custom_call.1']
    #allocation4 [shape = 's32[2]{0}', space=sflag, size = 0x8, scoped, tag = 'scoped memory for tpu_custom_call.1']
    #allocation5 [shape = 'u8[16384]{0}', space=vmem, size = 0x4000, scoped, tag = 'input window, operand 1']
    #allocation6 [shape = 's32[2]{0}', space=sflag, size = 0x8, scoped, tag = 'scoped memory for tpu_custom_call.1']
    #allocation7 [shape = 'u8[16384]{0}', space=vmem, size = 0x4000, scoped, tag = 'input window, operand 2']
    #allocation8 [shape = 'u8[4096]{0}', space=vmem, size = 0x1000, scoped, tag = 'input window, operand 3']
    #allocation9 [shape = 's32[2]{0}', space=sflag, size = 0x8, scoped, tag = 'scoped memory for tpu_custom_call.1']
    #allocation10 [shape = 'u8[16384]{0}', space=vmem, size = 0x4000, scoped, tag = 'input window, operand 4']
    #allocation11 [shape = 'u8[16384]{0}', space=vmem, size = 0x4000, scoped, tag = 'output window, operand 0']
    #allocation12 [shape = 'u8[16384]{0}', space=vmem, size = 0x4000, scoped, tag = 'output window, operand 1']
    #allocation13 [shape = 's32[2]{0}', space=sflag, size = 0x8, scoped, tag = 'scoped memory for tpu_custom_call.1']
    %12 = vsyncpa [#allocation3], 0
    %s13 = scalar_lea.sflag [#allocation3], 1
    %14 = vsyncpa %s13, 0
    %15 = vsyncpa [#allocation6], 0
    %s16 = scalar_lea.sflag [#allocation6], 1
    %17 = vsyncpa %s16, 0
    %18 = vsyncpa [#allocation9], 0
    %s19 = scalar_lea.sflag [#allocation9], 1
    %20 = vsyncpa %s19, 0
    %21 = vsyncpa [#allocation4], 0
    %s22 = scalar_lea.sflag [#allocation4], 1
    %23 = vsyncpa %s22, 0
    %24 = vsyncpa [#allocation13], 0
    %s25 = scalar_lea.sflag [#allocation13], 1
    %26 = vsyncpa %s25, 0
    loop: start=0, step=1, limit=4
    $region2: #{tpu_custom_call.1} parent=1 // loop_pre_header
      _
    $region3: #{tpu_custom_call.1} parent=1 // loop_header
      %s28 = sphi 0, %s32
      %p29 = scmp.ge.s32.totalorder %s28, 4
      %s35 = sphi 0, %s47
      %s36 = sphi 0, %s43
      %s37 = sphi 0, %s35
      %s38 = sphi 0, %s36
      %s39 = sphi 0, %s37
      %s40 = sphi 0, %s38
      %s52 = sphi 0, %s54
      %s55 = sphi 0, %s52
      %s56 = sphi 0, %s55
      %s72 = sphi 0, %s56
      %s78 = sphi 0, %s80
      %s81 = sphi 0, %s78
      %s82 = sphi 0, %s81
      %s98 = sphi 0, %s82
      %s104 = sphi 0, %s106
      %s107 = sphi 0, %s104
      %s108 = sphi 0, %s107
      %s124 = sphi 0, %s108
      %s132 = sphi 0, %s134
      %s135 = sphi 0, %s132
      %s136 = sphi 0, %s135
      %s152 = sphi 0, %s136
      %s160 = sphi 0, %s162
      %s163 = sphi 0, %s160
      %s164 = sphi 0, %s163
      %s180 = sphi 0, %s164
      %s188 = sphi 0, %s190
      %s191 = sphi 0, %s188
      %s192 = sphi 0, %s191
      %s208 = sphi 0, %s192
      %s216 = sphi 0, %s218
      %s219 = sphi 0, %s216
      %s220 = sphi 0, %s219
      %s236 = sphi 0, %s220
    $region4: #{tpu_custom_call.1} parent=1 // loop_header_branch
      %31 = sbr.rel (%p29) target = $region8
    $region5: #{tpu_custom_call.1} parent=1 // loop_body
      %s33 = ssub.s32 %s28, 1
      %s34 = ssub.s32 %s28, 2
      %s41 = sadd.s32 1, %s36
      %p42 = scmp.ge.s32.totalorder %s41, 1
      %s43 = scalar_select %p42, 0, %s41
      %s44 = sadd.s32 1, %s35
      %s45 = scalar_select %p42, %s44, %s35
      %p46 = scmp.ge.s32.totalorder %s45, 2
      %s47 = scalar_select %p46, 0, %s45
      %s48 = ssub.s32 %s35, %s47
      %s49 = ssub.s32 %s36, %s43
      %s50 = sor.u32 %s48, %s49
      %p51 = scmp.eq.s32.totalorder %s50, 0
      %s53 = sadd.s32 %s52, 1
      %s54 = scalar_select %p51, %s52, %s53
      %p57 = pneg %p51
      %p58 = scmp.eq.s32.totalorder %s28, 1
      %p59 = por %p57, %p58
      %p60 = scmp.ne.s32.totalorder %s52, %s55
      %p61 = scmp.eq.s32.totalorder %s28, 0
      %p62 = por %p60, %p61
      %p63 = scmp.ne.s32.totalorder %s52, %s55
      %p64 = scmp.eq.s32.totalorder %s33, 1
      %p65 = por %p63, %p64
      %p66 = scmp.ne.s32.totalorder %s55, %s56
      %p67 = scmp.eq.s32.totalorder %s33, 0
      %p68 = por %p66, %p67
      %p69 = scmp.ne.s32.totalorder %s55, %s56
      %p70 = scmp.eq.s32.totalorder %s34, 1
      %p71 = por %p69, %p70
      %p73 = scmp.ne.s32.totalorder %s56, %s72
      %p74 = scmp.eq.s32.totalorder %s34, 0
      %p75 = por %p73, %p74
      %s76 = ssub.s32 %s35, %s47
      %p77 = scmp.eq.s32.totalorder %s76, 0
      %s79 = sadd.s32 %s78, 1
      %s80 = scalar_select %p77, %s78, %s79
      %p83 = pneg %p77
      %p84 = scmp.eq.s32.totalorder %s28, 1
      %p85 = por %p83, %p84
      %p86 = scmp.ne.s32.totalorder %s78, %s81
      %p87 = scmp.eq.s32.totalorder %s28, 0
      %p88 = por %p86, %p87
      %p89 = scmp.ne.s32.totalorder %s78, %s81
      %p90 = scmp.eq.s32.totalorder %s33, 1
      %p91 = por %p89, %p90
      %p92 = scmp.ne.s32.totalorder %s81, %s82
      %p93 = scmp.eq.s32.totalorder %s33, 0
      %p94 = por %p92, %p93
      %p95 = scmp.ne.s32.totalorder %s81, %s82
      %p96 = scmp.eq.s32.totalorder %s34, 1
      %p97 = por %p95, %p96
      %p99 = scmp.ne.s32.totalorder %s82, %s98
      %p100 = scmp.eq.s32.totalorder %s34, 0
      %p101 = por %p99, %p100
      %s102 = ssub.s32 %s35, %s47
      %p103 = scmp.eq.s32.totalorder %s102, 0
      %s105 = sadd.s32 %s104, 1
      %s106 = scalar_select %p103, %s104, %s105
      %p109 = pneg %p103
      %p110 = scmp.eq.s32.totalorder %s28, 1
      %p111 = por %p109, %p110
      %p112 = scmp.ne.s32.totalorder %s104, %s107
      %p113 = scmp.eq.s32.totalorder %s28, 0
      %p114 = por %p112, %p113
      %p115 = scmp.ne.s32.totalorder %s104, %s107
      %p116 = scmp.eq.s32.totalorder %s33, 1
      %p117 = por %p115, %p116
      %p118 = scmp.ne.s32.totalorder %s107, %s108
      %p119 = scmp.eq.s32.totalorder %s33, 0
      %p120 = por %p118, %p119
      %p121 = scmp.ne.s32.totalorder %s107, %s108
      %p122 = scmp.eq.s32.totalorder %s34, 1
      %p123 = por %p121, %p122
      %p125 = scmp.ne.s32.totalorder %s108, %s124
      %p126 = scmp.eq.s32.totalorder %s34, 0
      %p127 = por %p125, %p126
      %s128 = ssub.s32 %s35, %s47
      %s129 = ssub.s32 %s36, %s43
      %s130 = sor.u32 %s128, %s129
      %p131 = scmp.eq.s32.totalorder %s130, 0
      %s133 = sadd.s32 %s132, 1
      %s134 = scalar_select %p131, %s132, %s133
      %p137 = pneg %p131
      %p138 = scmp.eq.s32.totalorder %s28, 1
      %p139 = por %p137, %p138
      %p140 = scmp.ne.s32.totalorder %s132, %s135
      %p141 = scmp.eq.s32.totalorder %s28, 0
      %p142 = por %p140, %p141
      %p143 = scmp.ne.s32.totalorder %s132, %s135
      %p144 = scmp.eq.s32.totalorder %s33, 1
      %p145 = por %p143, %p144
      %p146 = scmp.ne.s32.totalorder %s135, %s136
      %p147 = scmp.eq.s32.totalorder %s33, 0
      %p148 = por %p146, %p147
      %p149 = scmp.ne.s32.totalorder %s135, %s136
      %p150 = scmp.eq.s32.totalorder %s34, 1
      %p151 = por %p149, %p150
      %p153 = scmp.ne.s32.totalorder %s136, %s152
      %p154 = scmp.eq.s32.totalorder %s34, 0
      %p155 = por %p153, %p154
      %s156 = ssub.s32 %s35, %s47
      %s157 = ssub.s32 %s36, %s43
      %s158 = sor.u32 %s156, %s157
      %p159 = scmp.eq.s32.totalorder %s158, 0
      %s161 = sadd.s32 %s160, 1
      %s162 = scalar_select %p159, %s160, %s161
      %p165 = pneg %p159
      %p166 = scmp.eq.s32.totalorder %s28, 1
      %p167 = por %p165, %p166
      %p168 = scmp.ne.s32.totalorder %s160, %s163
      %p169 = scmp.eq.s32.totalorder %s28, 0
      %p170 = por %p168, %p169
      %p171 = scmp.ne.s32.totalorder %s160, %s163
      %p172 = scmp.eq.s32.totalorder %s33, 1
      %p173 = por %p171, %p172
      %p174 = scmp.ne.s32.totalorder %s163, %s164
      %p175 = scmp.eq.s32.totalorder %s33, 0
      %p176 = por %p174, %p175
      %p177 = scmp.ne.s32.totalorder %s163, %s164
      %p178 = scmp.eq.s32.totalorder %s34, 1
      %p179 = por %p177, %p178
      %p181 = scmp.ne.s32.totalorder %s164, %s180
      %p182 = scmp.eq.s32.totalorder %s34, 0
      %p183 = por %p181, %p182
      %s184 = ssub.s32 %s35, %s47
      %s185 = ssub.s32 %s36, %s43
      %s186 = sor.u32 %s184, %s185
      %p187 = scmp.eq.s32.totalorder %s186, 0
      %s189 = sadd.s32 %s188, 1
      %s190 = scalar_select %p187, %s188, %s189
      %p193 = pneg %p187
      %p194 = scmp.eq.s32.totalorder %s28, 1
      %p195 = por %p193, %p194
      %p196 = scmp.ne.s32.totalorder %s188, %s191
      %p197 = scmp.eq.s32.totalorder %s28, 0
      %p198 = por %p196, %p197
      %p199 = scmp.ne.s32.totalorder %s188, %s191
      %p200 = scmp.eq.s32.totalorder %s33, 1
      %p201 = por %p199, %p200
      %p202 = scmp.ne.s32.totalorder %s191, %s192
      %p203 = scmp.eq.s32.totalorder %s33, 0
      %p204 = por %p202, %p203
      %p205 = scmp.ne.s32.totalorder %s191, %s192
      %p206 = scmp.eq.s32.totalorder %s34, 1
      %p207 = por %p205, %p206
      %p209 = scmp.ne.s32.totalorder %s192, %s208
      %p210 = scmp.eq.s32.totalorder %s34, 0
      %p211 = por %p209, %p210
      %s212 = ssub.s32 %s35, %s47
      %s213 = ssub.s32 %s36, %s43
      %s214 = sor.u32 %s212, %s213
      %p215 = scmp.eq.s32.totalorder %s214, 0
      %s217 = sadd.s32 %s216, 1
      %s218 = scalar_select %p215, %s216, %s217
      %p221 = pneg %p215
      %p222 = scmp.eq.s32.totalorder %s28, 1
      %p223 = por %p221, %p222
      %p224 = scmp.ne.s32.totalorder %s216, %s219
      %p225 = scmp.eq.s32.totalorder %s28, 0
      %p226 = por %p224, %p225
      %p227 = scmp.ne.s32.totalorder %s216, %s219
      %p228 = scmp.eq.s32.totalorder %s33, 1
      %p229 = por %p227, %p228
      %p230 = scmp.ne.s32.totalorder %s219, %s220
      %p231 = scmp.eq.s32.totalorder %s33, 0
      %p232 = por %p230, %p231
      %p233 = scmp.ne.s32.totalorder %s219, %s220
      %p234 = scmp.eq.s32.totalorder %s34, 1
      %p235 = por %p233, %p234
      %p237 = scmp.ne.s32.totalorder %s220, %s236
      %p238 = scmp.eq.s32.totalorder %s34, 0
      %p239 = por %p237, %p238
      %p240 = scmp.le.s32.totalorder 1, %s28
      %p241 = scmp.lt.s32.totalorder %s28, 3
      %p242 = pnand %p240, %p241
      %p243 = pneg %p242
      // Predicated region
      $region9: #{tpu_custom_call.1} parent=5 // pred_check
        _
      $region10: #{tpu_custom_call.1} parent=5 // pred_check_branch
        %245 = sbr.rel (%p242) target = $region12
      $region11: #{tpu_custom_call.1} parent=5 // pred_region
        %s246 = ssub.s32 %s28, 1
      $region12: #{tpu_custom_call.1} parent=5 // pred_fallthru
        _
      %p247 = scmp.lt.s32.totalorder %s28, 2
      // Predicated region
      $region13: #{tpu_custom_call.1} parent=5 // pred_check
        %p248 = pneg %p247
      $region14: #{tpu_custom_call.1} parent=5 // pred_check_branch
        %250 = sbr.rel (%p248) target = $region16
      $region15: #{tpu_custom_call.1} parent=5 // pred_region
        // Predicated region
        $region17: #{tpu_custom_call.1} parent=15 // pred_check
          %p251 = pneg %p62
        $region18: #{tpu_custom_call.1} parent=15 // pred_check_branch
          %253 = sbr.rel (%p251) target = $region20
        $region19: #{tpu_custom_call.1} parent=15 // pred_region
          %s254 = sand.u32 %s52, 1
          %s255 = scalar_lea.sflag [#allocation3], %s254
          %s256 = sand.u32 %s52, 1
          %s257 = smul.addr %s256, 16
          %s258 = scalar_lea.vmem [#allocation2], %s257
          %s259 = smul.u32 2, %s35
          %s261 = ssub.s32 256, 256
          %262 = vsyncadd %s255, %s261
          %s263 = sadd.s32 %s36, %s259
          %s264 = smul.addr %s263, 128
          %s265 = scalar_lea.hbm %s0, %s264
          %s266 = sshll.u32 %s258, 4
          %s267 = int_to_ptr.vmem [resolvable:$true] %s266
          %272 = dma.hbm_to_vmem [thread:$0]  %s265, 256, %s267, %s255, 128, 128, 8
        $region20: #{tpu_custom_call.1} parent=15 // pred_fallthru
          _
        // Predicated region
        $region21: #{tpu_custom_call.1} parent=15 // pred_check
          %p273 = pneg %p88
        $region22: #{tpu_custom_call.1} parent=15 // pred_check_branch
          %275 = sbr.rel (%p273) target = $region24
        $region23: #{tpu_custom_call.1} parent=15 // pred_region
          %s276 = sand.u32 %s28, 1
          %s277 = scalar_lea.sflag [#allocation6], %s276
          %s278 = sand.u32 %s78, 1
          %s279 = smul.addr %s278, 16
          %s280 = scalar_lea.vmem [#allocation5], %s279
          %s281 = smul.u32 2, %s35
          %s283 = ssub.s32 256, 256
          %284 = vsyncadd %s277, %s283
          %s285 = smul.addr %s281, 128
          %s286 = scalar_lea.hbm %s1, %s285
          %s287 = sshll.u32 %s280, 4
          %s288 = int_to_ptr.vmem [resolvable:$true] %s287
          %293 = dma.hbm_to_vmem [thread:$0]  %s286, 256, %s288, %s277, 128, 128, 8
        $region24: #{tpu_custom_call.1} parent=15 // pred_fallthru
          _
        // Predicated region
        $region25: #{tpu_custom_call.1} parent=15 // pred_check
          %p294 = pneg %p114
        $region26: #{tpu_custom_call.1} parent=15 // pred_check_branch
          %296 = sbr.rel (%p294) target = $region28
        $region27: #{tpu_custom_call.1} parent=15 // pred_region
          %s297 = sand.u32 %s28, 1
          %s298 = scalar_lea.sflag [#allocation6], %s297
          %s299 = sand.u32 %s104, 1
          %s300 = smul.addr %s299, 16
          %s301 = scalar_lea.vmem [#allocation7], %s300
          %s302 = smul.u32 2, %s35
          %s304 = ssub.s32 256, 256
          %305 = vsyncadd %s298, %s304
          %s306 = smul.addr %s302, 128
          %s307 = scalar_lea.hbm %s2, %s306
          %s308 = sshll.u32 %s301, 4
          %s309 = int_to_ptr.vmem [resolvable:$true] %s308
          %314 = dma.hbm_to_vmem [thread:$0]  %s307, 256, %s309, %s298, 128, 128, 8
        $region28: #{tpu_custom_call.1} parent=15 // pred_fallthru
          _
        // Predicated region
        $region29: #{tpu_custom_call.1} parent=15 // pred_check
          %p315 = pneg %p142
        $region30: #{tpu_custom_call.1} parent=15 // pred_check_branch
          %317 = sbr.rel (%p315) target = $region32
        $region31: #{tpu_custom_call.1} parent=15 // pred_region
          %s318 = sand.u32 %s28, 1
          %s319 = scalar_lea.sflag [#allocation9], %s318
          %s320 = sand.u32 %s132, 1
          %s321 = smul.addr %s320, 4
          %s322 = scalar_lea.vmem [#allocation8], %s321
          %s323 = smul.u32 2, %s35
          %s325 = ssub.s32 64, 64
          %326 = vsyncadd %s319, %s325
          %s327 = sadd.s32 %s36, %s323
          %s328 = smul.addr %s327, 32
          %s329 = scalar_lea.hbm %s3, %s328
          %s330 = sshll.u32 %s322, 4
          %s331 = int_to_ptr.vmem [resolvable:$true] %s330
          %336 = dma.hbm_to_vmem [thread:$0]  %s329, 64, %s331, %s319, 32, 32, 2
        $region32: #{tpu_custom_call.1} parent=15 // pred_fallthru
          _
        // Predicated region
        $region33: #{tpu_custom_call.1} parent=15 // pred_check
          %p337 = pneg %p170
        $region34: #{tpu_custom_call.1} parent=15 // pred_check_branch
          %339 = sbr.rel (%p337) target = $region36
        $region35: #{tpu_custom_call.1} parent=15 // pred_region
          %s340 = sand.u32 %s28, 1
          %s341 = scalar_lea.sflag [#allocation9], %s340
          %s342 = sand.u32 %s160, 1
          %s343 = smul.addr %s342, 16
          %s344 = scalar_lea.vmem [#allocation10], %s343
          %s345 = smul.u32 2, %s35
          %s347 = ssub.s32 256, 256
          %348 = vsyncadd %s341, %s347
          %s349 = sadd.s32 %s36, %s345
          %s350 = smul.addr %s349, 128
          %s351 = scalar_lea.hbm %s4, %s350
          %s352 = sshll.u32 %s344, 4
          %s353 = int_to_ptr.vmem [resolvable:$true] %s352
          %358 = dma.hbm_to_vmem [thread:$0]  %s351, 256, %s353, %s341, 128, 128, 8
        $region36: #{tpu_custom_call.1} parent=15 // pred_fallthru
          _
      $region16: #{tpu_custom_call.1} parent=5 // pred_fallthru
        _
      %p359 = scmp.le.s32.totalorder 1, %s28
      %p360 = scmp.lt.s32.totalorder %s28, 3
      %p361 = pnand %p359, %p360
      %p362 = pneg %p361
      // Predicated region
      $region37: #{tpu_custom_call.1} parent=5 // pred_check
        _
      $region38: #{tpu_custom_call.1} parent=5 // pred_check_branch
        %364 = sbr.rel (%p361) target = $region40
      $region39: #{tpu_custom_call.1} parent=5 // pred_region
        %s365 = ssub.s32 %s28, 1
        %s366 = sand.u32 %s55, 1
        %s367 = scalar_lea.sflag [#allocation3], %s366
        %s368 = sand.u32 %s55, 1
        %s369 = smul.addr %s368, 16
        %s370 = scalar_lea.vmem [#allocation2], %s369
        // Predicated region
        $region41: #{tpu_custom_call.1} parent=39 // pred_check
          %p371 = pneg %p68
        $region42: #{tpu_custom_call.1} parent=39 // pred_check_branch
          %373 = sbr.rel (%p371) target = $region44
        $region43: #{tpu_custom_call.1} parent=39 // pred_region
          %374 = dma.done %s367, 256
        $region44: #{tpu_custom_call.1} parent=39 // pred_fallthru
          _
        %s375 = sand.u32 %s33, 1
        %s376 = scalar_lea.sflag [#allocation6], %s375
        %s377 = sand.u32 %s81, 1
        %s378 = smul.addr %s377, 16
        %s379 = scalar_lea.vmem [#allocation5], %s378
        // Predicated region
        $region45: #{tpu_custom_call.1} parent=39 // pred_check
          %p380 = pneg %p94
        $region46: #{tpu_custom_call.1} parent=39 // pred_check_branch
          %382 = sbr.rel (%p380) target = $region48
        $region47: #{tpu_custom_call.1} parent=39 // pred_region
          %383 = dma.done %s376, 256
        $region48: #{tpu_custom_call.1} parent=39 // pred_fallthru
          _
        %s384 = sand.u32 %s33, 1
        %s385 = scalar_lea.sflag [#allocation6], %s384
        %s386 = sand.u32 %s107, 1
        %s387 = smul.addr %s386, 16
        %s388 = scalar_lea.vmem [#allocation7], %s387
        // Predicated region
        $region49: #{tpu_custom_call.1} parent=39 // pred_check
          %p389 = pneg %p120
        $region50: #{tpu_custom_call.1} parent=39 // pred_check_branch
          %391 = sbr.rel (%p389) target = $region52
        $region51: #{tpu_custom_call.1} parent=39 // pred_region
          %392 = dma.done %s385, 256
        $region52: #{tpu_custom_call.1} parent=39 // pred_fallthru
          _
        %s393 = sand.u32 %s33, 1
        %s394 = scalar_lea.sflag [#allocation9], %s393
        %s395 = sand.u32 %s135, 1
        %s396 = smul.addr %s395, 4
        %s397 = scalar_lea.vmem [#allocation8], %s396
        // Predicated region
        $region53: #{tpu_custom_call.1} parent=39 // pred_check
          %p398 = pneg %p148
        $region54: #{tpu_custom_call.1} parent=39 // pred_check_branch
          %400 = sbr.rel (%p398) target = $region56
        $region55: #{tpu_custom_call.1} parent=39 // pred_region
          %401 = dma.done %s394, 64
        $region56: #{tpu_custom_call.1} parent=39 // pred_fallthru
          _
        %s402 = sand.u32 %s33, 1
        %s403 = scalar_lea.sflag [#allocation9], %s402
        %s404 = sand.u32 %s163, 1
        %s405 = smul.addr %s404, 16
        %s406 = scalar_lea.vmem [#allocation10], %s405
        // Predicated region
        $region57: #{tpu_custom_call.1} parent=39 // pred_check
          %p407 = pneg %p176
        $region58: #{tpu_custom_call.1} parent=39 // pred_check_branch
          %409 = sbr.rel (%p407) target = $region60
        $region59: #{tpu_custom_call.1} parent=39 // pred_region
          %410 = dma.done %s403, 256
        $region60: #{tpu_custom_call.1} parent=39 // pred_fallthru
          _
        %s411 = sand.u32 %s55, 1
        %s412 = scalar_lea.sflag [#allocation3], %s411
        %s413 = sand.u32 %s55, 1
        %s414 = smul.addr %s413, 16
        %s415 = scalar_lea.vmem [#allocation2], %s414
        %p416 = pneg %p68
        %p417 = pneg %p65
        %s418 = sand.u32 %s33, 1
        %s419 = scalar_lea.sflag [#allocation6], %s418
        %s420 = sand.u32 %s81, 1
        %s421 = smul.addr %s420, 16
        %s422 = scalar_lea.vmem [#allocation5], %s421
        %p423 = pneg %p94
        %p424 = pneg %p91
        %s425 = sand.u32 %s33, 1
        %s426 = scalar_lea.sflag [#allocation6], %s425
        %s427 = sand.u32 %s107, 1
        %s428 = smul.addr %s427, 16
        %s429 = scalar_lea.vmem [#allocation7], %s428
        %p430 = pneg %p120
        %p431 = pneg %p117
        %s432 = sand.u32 %s33, 1
        %s433 = scalar_lea.sflag [#allocation9], %s432
        %s434 = sand.u32 %s135, 1
        %s435 = smul.addr %s434, 4
        %s436 = scalar_lea.vmem [#allocation8], %s435
        %p437 = pneg %p148
        %p438 = pneg %p145
        %s439 = sand.u32 %s33, 1
        %s440 = scalar_lea.sflag [#allocation9], %s439
        %s441 = sand.u32 %s163, 1
        %s442 = smul.addr %s441, 16
        %s443 = scalar_lea.vmem [#allocation10], %s442
        %p444 = pneg %p176
        %p445 = pneg %p173
        %p446 = pneg %p204
        %p447 = pneg %p201
        %s448 = sand.u32 %s191, 1
        %s449 = scalar_lea.sflag [#allocation4], %s448
        %s450 = sand.u32 %s191, 1
        %s451 = smul.addr %s450, 16
        %s452 = scalar_lea.vmem [#allocation11], %s451
        %p453 = pneg %p232
        %p454 = pneg %p229
        %s455 = sand.u32 %s219, 1
        %s456 = scalar_lea.sflag [#allocation13], %s455
        %s457 = sand.u32 %s219, 1
        %s458 = smul.addr %s457, 16
        %s459 = scalar_lea.vmem [#allocation12], %s458
        %s460 = smul.u32 2, %s37
        %s461 = smul.u32 2, %s37
        %s462 = smul.u32 2, %s37
        %s463 = smul.u32 2, %s37
        %s464 = smul.u32 2, %s37
        %s465 = smul.u32 2, %s37
        %s466 = smul.u32 2, %s37
        %v469 = vld [vmem:[%s370] sm:$0xff]
        %v470 = vld [vmem:[%s370 + $0x8] sm:$0xff]
        %v471 = vmul.f32 %v469, 0.125
        %v472 = vmul.f32 %v470, 0.125
        %v473 = vld [vmem:[%s379] sm:$0xff]
        %v474 = vld [vmem:[%s379 + $0x8] sm:$0xff]
        %v475 = vld [vmem:[%s406] sm:$0xff]
        %v476 = vld [vmem:[%s406 + $0x8] sm:$0xff]
        %vm477 = vcmask 523264
        %v479 = vsel %vm477, %v471, 0
        %v482 = vsel %vm477, %v473, 0
        %484 = vmatprep.subr.mxu0 0.0
        %485 = vmatpush1.xpose.msra.mxu0 %v482
        %486 = vmatprep.subr.mxu0 0.0
        %487 = vmatpush1.xpose.msra.mxu0 0.0
        %488 = vmatprep.subr.mxu0 0.0
        %489 = vmatpush1.xpose.msra.mxu0 0.0
        %490 = vmatprep.subr.mxu0 0.0
        %491 = vmatpush1.xpose.msra.mxu0 0.0
        %492 = vmatprep.subr.mxu0 0.0
        %493 = vmatpush1.xpose.msra.mxu0 0.0
        %494 = vmatprep.subr.mxu0 0.0
        %495 = vmatpush1.xpose.msra.mxu0 0.0
        %496 = vmatprep.subr.mxu0 0.0
        %497 = vmatpush1.xpose.msra.mxu0 0.0
        %498 = vmatprep.subr.mxu0 0.0
        %499 = vmatpush1.xpose.msra.mxu0 0.0
        %500 = vmatprep.subr.mxu0 0.0
        %501 = vmatpush1.xpose.msra.mxu0 0.0
        %502 = vmatprep.subr.mxu0 0.0
        %503 = vmatpush1.xpose.msra.mxu0 0.0
        %504 = vmatprep.subr.mxu0 0.0
        %505 = vmatpush1.xpose.msra.mxu0 0.0
        %506 = vmatprep.subr.mxu0 0.0
        %507 = vmatpush1.xpose.msra.mxu0 0.0
        %508 = vmatprep.subr.mxu0 0.0
        %509 = vmatpush1.xpose.msra.mxu0 0.0
        %510 = vmatprep.subr.mxu0 0.0
        %511 = vmatpush1.xpose.msra.mxu0 0.0
        %512 = vmatprep.subr.mxu0 0.0
        %513 = vmatpush1.xpose.msra.mxu0 0.0
        %514 = vmatprep.subr.mxu0 0.0
        %515 = vmatpush1.xpose.msra.mxu0 0.0
        %516 = vmatprep.subr.mxu0 0.0
        %517 = vmatpush1.xpose.msra.mxu0 0.0
        %518 = vmatprep.subr.mxu0 0.0
        %519 = vmatpush1.xpose.msra.mxu0 0.0
        %520 = vmatprep.subr.mxu0 0.0
        %521 = vmatpush1.xpose.msra.mxu0 0.0
        %522 = vmatprep.subr.mxu0 0.0
        %523 = vmatpush1.xpose.msra.mxu0 0.0
        %524 = vmatprep.subr.mxu0 0.0
        %525 = vmatpush1.xpose.msra.mxu0 0.0
        %526 = vmatprep.subr.mxu0 0.0
        %527 = vmatpush1.xpose.msra.mxu0 0.0
        %528 = vmatprep.subr.mxu0 0.0
        %529 = vmatpush1.xpose.msra.mxu0 0.0
        %530 = vmatprep.subr.mxu0 0.0
        %531 = vmatpush1.xpose.msra.mxu0 0.0
        %532 = vmatprep.subr.mxu0 0.0
        %533 = vmatpush1.xpose.msra.mxu0 0.0
        %534 = vmatprep.subr.mxu0 0.0
        %535 = vmatpush1.xpose.msra.mxu0 0.0
        %536 = vmatprep.subr.mxu0 0.0
        %537 = vmatpush1.xpose.msra.mxu0 0.0
        %538 = vmatprep.subr.mxu0 0.0
        %539 = vmatpush1.xpose.msra.mxu0 0.0
        %540 = vmatprep.subr.mxu0 0.0
        %541 = vmatpush1.xpose.msra.mxu0 0.0
        %542 = vmatprep.subr.mxu0 0.0
        %543 = vmatpush1.xpose.msra.mxu0 0.0
        %544 = vmatprep.subr.mxu0 0.0
        %545 = vmatpush1.xpose.msra.mxu0 0.0
        %546 = vmatprep.subr.mxu0 0.0
        %547 = vmatpush1.xpose.msra.mxu0 0.0
        %548 = vmatprep.mubr.f32.mxu0 0.0
        %549 = vmatmul.mubr.f32.gmra.mrb[0].mxu0 %v479
        %v550 = vpop.f32.mrb[0].mxu0
        %v551 = vadd.f32 %v475, %v550
        %v552 = vpop.f32.mrb[0].mxu0
        %553 = vdwg.mxu0
        %v555 = vsel %vm477, %v472, 0
        %v558 = vsel %vm477, %v474, 0
        %560 = vmatprep.subr.mxu0 0.0
        %561 = vmatpush1.xpose.msra.mxu0 %v558
        %562 = vmatprep.subr.mxu0 0.0
        %563 = vmatpush1.xpose.msra.mxu0 0.0
        %564 = vmatprep.subr.mxu0 0.0
        %565 = vmatpush1.xpose.msra.mxu0 0.0
        %566 = vmatprep.subr.mxu0 0.0
        %567 = vmatpush1.xpose.msra.mxu0 0.0
        %568 = vmatprep.subr.mxu0 0.0
        %569 = vmatpush1.xpose.msra.mxu0 0.0
        %570 = vmatprep.subr.mxu0 0.0
        %571 = vmatpush1.xpose.msra.mxu0 0.0
        %572 = vmatprep.subr.mxu0 0.0
        %573 = vmatpush1.xpose.msra.mxu0 0.0
        %574 = vmatprep.subr.mxu0 0.0
        %575 = vmatpush1.xpose.msra.mxu0 0.0
        %576 = vmatprep.subr.mxu0 0.0
        %577 = vmatpush1.xpose.msra.mxu0 0.0
        %578 = vmatprep.subr.mxu0 0.0
        %579 = vmatpush1.xpose.msra.mxu0 0.0
        %580 = vmatprep.subr.mxu0 0.0
        %581 = vmatpush1.xpose.msra.mxu0 0.0
        %582 = vmatprep.subr.mxu0 0.0
        %583 = vmatpush1.xpose.msra.mxu0 0.0
        %584 = vmatprep.subr.mxu0 0.0
        %585 = vmatpush1.xpose.msra.mxu0 0.0
        %586 = vmatprep.subr.mxu0 0.0
        %587 = vmatpush1.xpose.msra.mxu0 0.0
        %588 = vmatprep.subr.mxu0 0.0
        %589 = vmatpush1.xpose.msra.mxu0 0.0
        %590 = vmatprep.subr.mxu0 0.0
        %591 = vmatpush1.xpose.msra.mxu0 0.0
        %592 = vmatprep.subr.mxu0 0.0
        %593 = vmatpush1.xpose.msra.mxu0 0.0
        %594 = vmatprep.subr.mxu0 0.0
        %595 = vmatpush1.xpose.msra.mxu0 0.0
        %596 = vmatprep.subr.mxu0 0.0
        %597 = vmatpush1.xpose.msra.mxu0 0.0
        %598 = vmatprep.subr.mxu0 0.0
        %599 = vmatpush1.xpose.msra.mxu0 0.0
        %600 = vmatprep.subr.mxu0 0.0
        %601 = vmatpush1.xpose.msra.mxu0 0.0
        %602 = vmatprep.subr.mxu0 0.0
        %603 = vmatpush1.xpose.msra.mxu0 0.0
        %604 = vmatprep.subr.mxu0 0.0
        %605 = vmatpush1.xpose.msra.mxu0 0.0
        %606 = vmatprep.subr.mxu0 0.0
        %607 = vmatpush1.xpose.msra.mxu0 0.0
        %608 = vmatprep.subr.mxu0 0.0
        %609 = vmatpush1.xpose.msra.mxu0 0.0
        %610 = vmatprep.subr.mxu0 0.0
        %611 = vmatpush1.xpose.msra.mxu0 0.0
        %612 = vmatprep.subr.mxu0 0.0
        %613 = vmatpush1.xpose.msra.mxu0 0.0
        %614 = vmatprep.subr.mxu0 0.0
        %615 = vmatpush1.xpose.msra.mxu0 0.0
        %616 = vmatprep.subr.mxu0 0.0
        %617 = vmatpush1.xpose.msra.mxu0 0.0
        %618 = vmatprep.subr.mxu0 0.0
        %619 = vmatpush1.xpose.msra.mxu0 0.0
        %620 = vmatprep.subr.mxu0 0.0
        %621 = vmatpush1.xpose.msra.mxu0 0.0
        %622 = vmatprep.subr.mxu0 0.0
        %623 = vmatpush1.xpose.msra.mxu0 0.0
        %624 = vmatprep.mubr.f32.mxu0 0.0
        %625 = vmatmul.mubr.f32.gmra.mrb[0].mxu0 %v555
        %v626 = vpop.f32.mrb[0].mxu0
        %v627 = vadd.f32 %v476, %v626
        %v628 = vpop.f32.mrb[0].mxu0
        %629 = vdwg.mxu0
        %v630 = vld [vmem:[%s397] sm:$0x3]
        %v631 = vld [vmem:[%s397 + $0x2] sm:$0x3]
        %vm632 = vnez %v630
        %vm633 = vnez %v631
        %v634 = vsel %vm632, 16843009, 0
        %v635 = vsel %vm633, 16843009, 0
        %v636 = vunpack.c.0.s8 %v634
        %v637 = vunpack.c.0.s8 %v635
        %vm638 = vcmp.ne.s32.totalorder %v636, 0
        %vm639 = vcmp.ne.s32.totalorder %v637, 0
        %v640 = vsel %vm638, -1e+09, %v551
        %v641 = vsel %vm639, -1e+09, %v627
        %vm642 = vcmask 64512
        %v643 = vsel %vm642, %v640, -inf
        %644 = vmax.xlane.f32.xlu0 %v643
        %v645 = vpop.xlane.xlu0 %644
        %v646 = vsel %vm642, %v641, -inf
        %647 = vmax.xlane.f32.xlu0 %v646
        %v648 = vpop.xlane.xlu0 %647
        %v649 = vsub.f32 %v640, %v645
        %v650 = vsub.f32 %v641, %v648
        %v651 = vmul.f32 %v649, 1.442695
        %v652 = vpow.pop %v651
        %v653 = vmul.f32 %v650, 1.442695
        %v654 = vpow.pop %v653
        %v655 = vsel %vm642, %v652, 0.0
        %656 = vadd.xlane.f32.xlu0 %v655
        %v657 = vpop.xlane.xlu0 %656
        %v658 = vsel %vm642, %v654, 0.0
        %659 = vadd.xlane.f32.xlu0 %v658
        %v660 = vpop.xlane.xlu0 %659
        %v661 = vrcp.pop %v657
        %v662 = vrcp.pop %v660
        %v663 = vmul.f32 %v652, %v661
        %v664 = vmul.f32 %v654, %v662
        %v665 = vld [vmem:[%s388] sm:$0xff]
        %v666 = vld [vmem:[%s388 + $0x8] sm:$0xff]
        %v668 = vsel %vm642, %v663, 0
        %670 = vmatprep.subr.mxu0 0.0
        %671 = vmatpush1.msra.mxu0 %v665
        %672 = vmatprep.subr.mxu0 0.0
        %673 = vmatpush1.msra.mxu0 0.0
        %674 = vmatprep.subr.mxu0 0.0
        %675 = vmatpush1.msra.mxu0 0.0
        %676 = vmatprep.subr.mxu0 0.0
        %677 = vmatpush1.msra.mxu0 0.0
        %678 = vmatprep.subr.mxu0 0.0
        %679 = vmatpush1.msra.mxu0 0.0
        %680 = vmatprep.subr.mxu0 0.0
        %681 = vmatpush1.msra.mxu0 0.0
        %682 = vmatprep.subr.mxu0 0.0
        %683 = vmatpush1.msra.mxu0 0.0
        %684 = vmatprep.subr.mxu0 0.0
        %685 = vmatpush1.msra.mxu0 0.0
        %686 = vmatprep.subr.mxu0 0.0
        %687 = vmatpush1.msra.mxu0 0.0
        %688 = vmatprep.subr.mxu0 0.0
        %689 = vmatpush1.msra.mxu0 0.0
        %690 = vmatprep.subr.mxu0 0.0
        %691 = vmatpush1.msra.mxu0 0.0
        %692 = vmatprep.subr.mxu0 0.0
        %693 = vmatpush1.msra.mxu0 0.0
        %694 = vmatprep.subr.mxu0 0.0
        %695 = vmatpush1.msra.mxu0 0.0
        %696 = vmatprep.subr.mxu0 0.0
        %697 = vmatpush1.msra.mxu0 0.0
        %698 = vmatprep.subr.mxu0 0.0
        %699 = vmatpush1.msra.mxu0 0.0
        %700 = vmatprep.subr.mxu0 0.0
        %701 = vmatpush1.msra.mxu0 0.0
        %702 = vmatprep.subr.mxu0 0.0
        %703 = vmatpush1.msra.mxu0 0.0
        %704 = vmatprep.subr.mxu0 0.0
        %705 = vmatpush1.msra.mxu0 0.0
        %706 = vmatprep.subr.mxu0 0.0
        %707 = vmatpush1.msra.mxu0 0.0
        %708 = vmatprep.subr.mxu0 0.0
        %709 = vmatpush1.msra.mxu0 0.0
        %710 = vmatprep.subr.mxu0 0.0
        %711 = vmatpush1.msra.mxu0 0.0
        %712 = vmatprep.subr.mxu0 0.0
        %713 = vmatpush1.msra.mxu0 0.0
        %714 = vmatprep.subr.mxu0 0.0
        %715 = vmatpush1.msra.mxu0 0.0
        %716 = vmatprep.subr.mxu0 0.0
        %717 = vmatpush1.msra.mxu0 0.0
        %718 = vmatprep.subr.mxu0 0.0
        %719 = vmatpush1.msra.mxu0 0.0
        %720 = vmatprep.subr.mxu0 0.0
        %721 = vmatpush1.msra.mxu0 0.0
        %722 = vmatprep.subr.mxu0 0.0
        %723 = vmatpush1.msra.mxu0 0.0
        %724 = vmatprep.subr.mxu0 0.0
        %725 = vmatpush1.msra.mxu0 0.0
        %726 = vmatprep.subr.mxu0 0.0
        %727 = vmatpush1.msra.mxu0 0.0
        %728 = vmatprep.subr.mxu0 0.0
        %729 = vmatpush1.msra.mxu0 0.0
        %730 = vmatprep.subr.mxu0 0.0
        %731 = vmatpush1.msra.mxu0 0.0
        %732 = vmatprep.subr.mxu0 0.0
        %733 = vmatpush1.msra.mxu0 0.0
        %734 = vmatprep.mubr.f32.mxu0 0.0
        %735 = vmatmul.mubr.f32.gmra.mrb[0].mxu0 %v668
        %v736 = vpop.f32.mrb[0].mxu0
        %v737 = vadd.f32 0.0, %v736
        %v738 = vpop.f32.mrb[0].mxu0
        %739 = vdwg.mxu0
        %v741 = vsel %vm642, %v664, 0
        %743 = vmatprep.subr.mxu0 0.0
        %744 = vmatpush1.msra.mxu0 %v666
        %745 = vmatprep.subr.mxu0 0.0
        %746 = vmatpush1.msra.mxu0 0.0
        %747 = vmatprep.subr.mxu0 0.0
        %748 = vmatpush1.msra.mxu0 0.0
        %749 = vmatprep.subr.mxu0 0.0
        %750 = vmatpush1.msra.mxu0 0.0
        %751 = vmatprep.subr.mxu0 0.0
        %752 = vmatpush1.msra.mxu0 0.0
        %753 = vmatprep.subr.mxu0 0.0
        %754 = vmatpush1.msra.mxu0 0.0
        %755 = vmatprep.subr.mxu0 0.0
        %756 = vmatpush1.msra.mxu0 0.0
        %757 = vmatprep.subr.mxu0 0.0
        %758 = vmatpush1.msra.mxu0 0.0
        %759 = vmatprep.subr.mxu0 0.0
        %760 = vmatpush1.msra.mxu0 0.0
        %761 = vmatprep.subr.mxu0 0.0
        %762 = vmatpush1.msra.mxu0 0.0
        %763 = vmatprep.subr.mxu0 0.0
        %764 = vmatpush1.msra.mxu0 0.0
        %765 = vmatprep.subr.mxu0 0.0
        %766 = vmatpush1.msra.mxu0 0.0
        %767 = vmatprep.subr.mxu0 0.0
        %768 = vmatpush1.msra.mxu0 0.0
        %769 = vmatprep.subr.mxu0 0.0
        %770 = vmatpush1.msra.mxu0 0.0
        %771 = vmatprep.subr.mxu0 0.0
        %772 = vmatpush1.msra.mxu0 0.0
        %773 = vmatprep.subr.mxu0 0.0
        %774 = vmatpush1.msra.mxu0 0.0
        %775 = vmatprep.subr.mxu0 0.0
        %776 = vmatpush1.msra.mxu0 0.0
        %777 = vmatprep.subr.mxu0 0.0
        %778 = vmatpush1.msra.mxu0 0.0
        %779 = vmatprep.subr.mxu0 0.0
        %780 = vmatpush1.msra.mxu0 0.0
        %781 = vmatprep.subr.mxu0 0.0
        %782 = vmatpush1.msra.mxu0 0.0
        %783 = vmatprep.subr.mxu0 0.0
        %784 = vmatpush1.msra.mxu0 0.0
        %785 = vmatprep.subr.mxu0 0.0
        %786 = vmatpush1.msra.mxu0 0.0
        %787 = vmatprep.subr.mxu0 0.0
        %788 = vmatpush1.msra.mxu0 0.0
        %789 = vmatprep.subr.mxu0 0.0
        %790 = vmatpush1.msra.mxu0 0.0
        %791 = vmatprep.subr.mxu0 0.0
        %792 = vmatpush1.msra.mxu0 0.0
        %793 = vmatprep.subr.mxu0 0.0
        %794 = vmatpush1.msra.mxu0 0.0
        %795 = vmatprep.subr.mxu0 0.0
        %796 = vmatpush1.msra.mxu0 0.0
        %797 = vmatprep.subr.mxu0 0.0
        %798 = vmatpush1.msra.mxu0 0.0
        %799 = vmatprep.subr.mxu0 0.0
        %800 = vmatpush1.msra.mxu0 0.0
        %801 = vmatprep.subr.mxu0 0.0
        %802 = vmatpush1.msra.mxu0 0.0
        %803 = vmatprep.subr.mxu0 0.0
        %804 = vmatpush1.msra.mxu0 0.0
        %805 = vmatprep.subr.mxu0 0.0
        %806 = vmatpush1.msra.mxu0 0.0
        %807 = vmatprep.mubr.f32.mxu0 0.0
        %808 = vmatmul.mubr.f32.gmra.mrb[0].mxu0 %v741
        %v809 = vpop.f32.mrb[0].mxu0
        %v810 = vadd.f32 0.0, %v809
        %v811 = vpop.f32.mrb[0].mxu0
        %812 = vdwg.mxu0
        %813 = vst.msk [vmem:[%s452] sm:$0xff] %vm477, %v737
        %814 = vst.msk [vmem:[%s452 + $0x8] sm:$0xff] %vm477, %v810
        %815 = vst.msk [vmem:[%s459] sm:$0xff] %vm642, %v663
        %816 = vst.msk [vmem:[%s459 + $0x8] sm:$0xff] %vm642, %v664
        %s817 = sand.u32 %s191, 1
        %s818 = scalar_lea.sflag [#allocation4], %s817
        %s819 = sand.u32 %s191, 1
        %s820 = smul.addr %s819, 16
        %s821 = scalar_lea.vmem [#allocation11], %s820
        %s822 = sand.u32 %s219, 1
        %s823 = scalar_lea.sflag [#allocation13], %s822
        %s824 = sand.u32 %s219, 1
        %s825 = smul.addr %s824, 16
        %s826 = scalar_lea.vmem [#allocation12], %s825
        // Predicated region
        $region61: #{tpu_custom_call.1} parent=39 // pred_check
          %p827 = pneg %p201
        $region62: #{tpu_custom_call.1} parent=39 // pred_check_branch
          %829 = sbr.rel (%p827) target = $region64
        $region63: #{tpu_custom_call.1} parent=39 // pred_region
          %s830 = smul.u32 2, %s37
          %s832 = ssub.s32 256, 256
          %833 = vsyncadd %s818, %s832
          %s834 = sadd.s32 %s38, %s830
          %s835 = smul.addr %s834, 128
          %s836 = scalar_lea.hbm %s5, %s835
          %s837 = sshll.u32 %s821, 4
          %s838 = int_to_ptr.vmem [resolvable:$true] %s837
          %843 = dma.vmem_to_hbm [thread:$0]  %s838, 256, %s836, %s818, 128, 128, 8
        $region64: #{tpu_custom_call.1} parent=39 // pred_fallthru
          _
        // Predicated region
        $region65: #{tpu_custom_call.1} parent=39 // pred_check
          %p844 = pneg %p229
        $region66: #{tpu_custom_call.1} parent=39 // pred_check_branch
          %846 = sbr.rel (%p844) target = $region68
        $region67: #{tpu_custom_call.1} parent=39 // pred_region
          %s847 = smul.u32 2, %s37
          %s849 = ssub.s32 256, 256
          %850 = vsyncadd %s823, %s849
          %s851 = sadd.s32 %s38, %s847
          %s852 = smul.addr %s851, 128
          %s853 = scalar_lea.hbm %s6, %s852
          %s854 = sshll.u32 %s826, 4
          %s855 = int_to_ptr.vmem [resolvable:$true] %s854
          %860 = dma.vmem_to_hbm [thread:$0]  %s855, 256, %s853, %s823, 128, 128, 8
        $region68: #{tpu_custom_call.1} parent=39 // pred_fallthru
          _
      $region40: #{tpu_custom_call.1} parent=5 // pred_fallthru
        _
      %p861 = scmp.le.s32.totalorder 2, %s28
      // Predicated region
      $region69: #{tpu_custom_call.1} parent=5 // pred_check
        %p862 = pneg %p861
      $region70: #{tpu_custom_call.1} parent=5 // pred_check_branch
        %864 = sbr.rel (%p862) target = $region72
      $region71: #{tpu_custom_call.1} parent=5 // pred_region
        %s865 = ssub.s32 %s28, 2
        // Predicated region
        $region73: #{tpu_custom_call.1} parent=71 // pred_check
          %p866 = pneg %p207
        $region74: #{tpu_custom_call.1} parent=71 // pred_check_branch
          %868 = sbr.rel (%p866) target = $region76
        $region75: #{tpu_custom_call.1} parent=71 // pred_region
          %s869 = sand.u32 %s192, 1
          %s870 = scalar_lea.sflag [#allocation4], %s869
          %s871 = sand.u32 %s192, 1
          %s872 = smul.addr %s871, 16
          %s873 = scalar_lea.vmem [#allocation11], %s872
          %874 = dma.done %s870, 256
        $region76: #{tpu_custom_call.1} parent=71 // pred_fallthru
          _
        // Predicated region
        $region77: #{tpu_custom_call.1} parent=71 // pred_check
          %p875 = pneg %p235
        $region78: #{tpu_custom_call.1} parent=71 // pred_check_branch
          %877 = sbr.rel (%p875) target = $region80
        $region79: #{tpu_custom_call.1} parent=71 // pred_region
          %s878 = sand.u32 %s220, 1
          %s879 = scalar_lea.sflag [#allocation13], %s878
          %s880 = sand.u32 %s220, 1
          %s881 = smul.addr %s880, 16
          %s882 = scalar_lea.vmem [#allocation12], %s881
          %883 = dma.done %s879, 256
        $region80: #{tpu_custom_call.1} parent=71 // pred_fallthru
          _
      $region72: #{tpu_custom_call.1} parent=5 // pred_fallthru
        _
    $region6: #{tpu_custom_call.1} parent=1 // loop_footer
      %s32 = sadd.s32 1, %s28
    $region7: #{tpu_custom_call.1} parent=1 // loop_footer_branch
      %27 = sbr.rel target = $region3
    $region8: #{tpu_custom_call.1} parent=1 // loop_exit
      _
    %884 = vsyncpa [#allocation3], 1
    %s885 = scalar_lea.sflag [#allocation3], 1
    %886 = vsyncpa %s885, 1
    %887 = vsyncpa [#allocation6], 1
    %s888 = scalar_lea.sflag [#allocation6], 1
    %889 = vsyncpa %s888, 1
    %890 = vsyncpa [#allocation9], 1
    %s891 = scalar_lea.sflag [#allocation9], 1
    %892 = vsyncpa %s891, 1
    %893 = vsyncpa [#allocation4], 1
    %s894 = scalar_lea.sflag [#allocation4], 1
    %895 = vsyncpa %s894, 1
    %896 = vsyncpa [#allocation13], 1
    %s897 = scalar_lea.sflag [#allocation13], 1
    %898 = vsyncpa %s897, 1

</llo_original>
